<compile_context>
chip_gen: v6e
topology: v6e:2x2x1
jax: 0.10.0
libtpu: 0.0.40
codegen_flags: <defaults>
</compile_context>

<pallas_src>
import jax
import jax.numpy as jnp
from jax.experimental import pallas as pl
from jax.experimental.pallas import tpu as pltpu

GEM_P = 3.0          # GeM p parameter (Parameter(torch.ones(1) * 3))
GEM_EPS = 1e-6       # GeM clamp eps
BN_EPS = 1e-5        # nn.BatchNorm2d default eps
NORM_EPS = 1e-12     # F.normalize default eps
_MISH_CLAMP = 20.0   # exp clamp; tanh(softplus(x)) == 1 to f32 precision past this


def _tail_kernel(x_ref, w_ref, b_ref, o_ref):
    # x_ref: (TB, HW, C)  bf16 activations for TB batch elements
    # w_ref: (C, C)       bf16 1x1-conv weight (C_in, C_out), BN scale folded in
    # b_ref: (1, C)       f32  folded conv-bias + BN shift
    # o_ref: (TB, C)      f32  L2-normalized embeddings
    TB, HW, C = x_ref.shape

    x = x_ref[...].reshape(TB * HW, C).astype(jnp.float32)

    # Mish: x * tanh(softplus(x)).  Single-exp rewrite:
    #   tanh(log1p(e^x)) = ((1+e^x)^2 - 1) / ((1+e^x)^2 + 1)
    t = jnp.exp(jnp.minimum(x, _MISH_CLAMP))
    u = 1.0 + t
    u2 = u * u
    m = x * (u2 - 1.0) * pl.reciprocal(u2 + 1.0, approx=True)

    # 1x1 conv (+ folded BN affine) == one bf16 MXU matmul with f32 accumulation.
    y = jnp.dot(m.astype(jnp.bfloat16), w_ref[...],
                preferred_element_type=jnp.float32)
    y = y + b_ref[...]

    # GeM (p=3): clamp, cube by multiplication (VPU only), spatial mean, cube root.
    c = jnp.maximum(y, GEM_EPS)
    z = (c * c) * c
    g = jnp.mean(z.reshape(TB, HW, C), axis=1)          # (TB, C)
    g = g ** (1.0 / GEM_P)                              # only (TB, C): pow is cheap

    # F.normalize: L2 over channels, rsqrt instead of sqrt + divide.
    norm_sq = jnp.sum(g * g, axis=-1, keepdims=True)
    inv = jax.lax.rsqrt(jnp.maximum(norm_sq, NORM_EPS * NORM_EPS))
    o_ref[...] = g * inv


def _choose_tb(batch, hw, max_rows=2048):
    """Smallest divisor of `batch` giving >= 256 matmul rows (fills the MXU),
    else the largest divisor that keeps the block under `max_rows` rows."""
    divisors = [d for d in range(1, batch + 1)
                if batch % d == 0 and d * hw <= max_rows]
    if not divisors:
        return 1
    for d in divisors:
        if d * hw >= 256:
            return d
    return divisors[-1]


def arc_model_tail(x_nhwc, conv_w, conv_b, bn_gamma, bn_beta, bn_mean, bn_var):
    """Tail forward from an NHWC backbone feature map.

    x_nhwc: (B, H, W, C) feature map.  Returns (B, C) L2-normalized embeddings.
    Feeding NHWC avoids a standalone NCHW->NHWC transpose (a full HBM round-trip).
    """
    B, H, W, C = x_nhwc.shape
    HW = H * W

    x = x_nhwc.reshape(B, HW, C).astype(jnp.bfloat16)    # contiguous merge; bf16 DMA

    # Fold conv bias + eval-mode BN into the 1x1 weight (wrapper glue, not hot path).
    w_t = conv_w.reshape(C, C).T.astype(jnp.float32)                     # (C_in, C_out)
    inv_std = 1.0 / jnp.sqrt(bn_var.astype(jnp.float32) + BN_EPS)
    scale = bn_gamma.astype(jnp.float32) * inv_std                       # (C,)
    shift = bn_beta.astype(jnp.float32) - bn_mean.astype(jnp.float32) * scale
    w_f = (w_t * scale[None, :]).astype(jnp.bfloat16)                    # bf16 weight
    b_f = (conv_b.astype(jnp.float32) * scale + shift).reshape(1, C)     # f32 bias

    TB = _choose_tb(B, HW)
    grid = (B // TB,)

    # Scoped-VMEM estimate: double-buffered blocks + f32 elementwise intermediates.
    x_blk = TB * HW * C * 2
    interm = 6 * TB * HW * C * 4
    est = 2 * x_blk + 2 * C * C * 2 + interm + 2 * max(TB, 8) * C * 4 + (2 << 20)
    vmem_limit = int(min(max(est, 16 << 20), 56 << 20))

    out = pl.pallas_call(
        _tail_kernel,
        out_shape=jax.ShapeDtypeStruct((B, C), jnp.float32),
        grid_spec=pltpu.PrefetchScalarGridSpec(
            num_scalar_prefetch=0,
            grid=grid,
            in_specs=[
                pl.BlockSpec((TB, HW, C), lambda b: (b, 0, 0)),
                # Constant index_map; bf16 already halves its VMEM footprint.  On v7x
                # (64 MiB VMEM) pipeline_mode=pl.Buffered(1) can drop the 2nd buffer.
                pl.BlockSpec((C, C), lambda b: (0, 0)),
                pl.BlockSpec((1, C), lambda b: (0, 0)),
            ],
            out_specs=pl.BlockSpec((TB, C), lambda b: (b, 0)),
        ),
        compiler_params=pltpu.CompilerParams(
            dimension_semantics=("parallel",),   # shards grid steps across v7x's 2 TCs
            vmem_limit_bytes=vmem_limit,
        ),
    )(x, w_f, b_f)

    return out


def arc_model_tail_nchw(x_nchw, *params):
    """Compat wrapper for the PyTorch NCHW layout (pays one transpose in HBM)."""
    return arc_model_tail(jnp.transpose(x_nchw, (0, 2, 3, 1)), *params)


def _reference_nhwc(x_nhwc, conv_w, conv_b, bn_gamma, bn_beta, bn_mean, bn_var):
    """Pure-JAX f32 reference of the same forward (NHWC layout)."""
    x = x_nhwc.astype(jnp.float32)
    B, H, W, C = x.shape
    # Mish
    m = x * jnp.tanh(jnp.logaddexp(x, 0.0))
    # 1x1 conv
    w = conv_w.reshape(C, C)                                   # (C_out, C_in)
    y = jnp.einsum('bhwc,oc->bhwo', m, w) + conv_b.reshape(1, 1, 1, C)
    # BatchNorm2d (eval)
    inv_std = 1.0 / jnp.sqrt(bn_var + BN_EPS)
    y = (y - bn_mean) * inv_std * bn_gamma + bn_beta
    # GeM
    g = jnp.mean(jnp.maximum(y, GEM_EPS) ** GEM_P, axis=(1, 2)) ** (1.0 / GEM_P)
    # F.normalize
    n = jnp.sqrt(jnp.sum(g * g, axis=1, keepdims=True))
    return g / jnp.maximum(n, NORM_EPS)


if __name__ == "__main__":
    # Small stand-in for the backbone feature map (in_features = C).
    B, C, H, W = 2, 128, 8, 8

    key = jax.random.PRNGKey(0)
    kx, kw, kb, kg, kbeta, km, kv = jax.random.split(key, 7)

    x_nhwc = jax.random.normal(kx, (B, H, W, C), dtype=jnp.float32)
    conv_w = 0.05 * jax.random.normal(kw, (C, C, 1, 1), dtype=jnp.float32)
    conv_b = 0.01 * jax.random.normal(kb, (C,), dtype=jnp.float32)
    bn_gamma = 1.0 + 0.1 * jax.random.normal(kg, (C,), dtype=jnp.float32)
    bn_beta = 0.1 * jax.random.normal(kbeta, (C,), dtype=jnp.float32)
    bn_mean = 0.1 * jax.random.normal(km, (C,), dtype=jnp.float32)
    bn_var = jax.random.uniform(kv, (C,), minval=0.5, maxval=1.5, dtype=jnp.float32)

    out = arc_model_tail(x_nhwc, conv_w, conv_b, bn_gamma, bn_beta, bn_mean, bn_var)
    out = jax.block_until_ready(out)

    ref = _reference_nhwc(x_nhwc, conv_w, conv_b, bn_gamma, bn_beta, bn_mean, bn_var)
    assert out.shape == (B, C)
    # bf16 activation/matmul path: validate against the f32 reference with a looser
    # tolerance (accumulation and the GeM/normalize epilogue stay in f32).
    assert jnp.allclose(out, ref, atol=1e-2, rtol=1e-2), "mismatch vs JAX reference"

    print("KERNEL_OK")
</pallas_src>

<mosaic_0001>
module attributes {stable_mosaic.version = 11 : i64} {
  func.func @_tail_kernel(%arg0: i32, %arg1: memref<2x64x128xbf16, #tpu.memory_space<vmem>>, %arg2: memref<128x128xbf16, #tpu.memory_space<vmem>>, %arg3: memref<1x128xf32, #tpu.memory_space<vmem>>, %arg4: memref<2x128xf32, #tpu.memory_space<vmem>>) attributes {dimension_semantics = [#tpu.dimension_semantics<parallel>], iteration_bounds = array<i64: 1>, scalar_prefetch = 0 : i64, scratch_operands = 0 : i64, tpu.core_type = #tpu.core_type<tc>, window_params = [{transform_indices = @transform_0, window_bounds = array<i64: 2, 64, 128>}, {pipeline_mode = #tpu.pipeline_mode<synchronous>, transform_indices = @transform_1, window_bounds = array<i64: 128, 128>}, {pipeline_mode = #tpu.pipeline_mode<synchronous>, transform_indices = @transform_2, window_bounds = array<i64: 1, 128>}, {transform_indices = @transform_3, window_bounds = array<i64: 2, 128>}]} {
    %c0 = arith.constant 0 : index
    %c0_0 = arith.constant 0 : index
    %c0_1 = arith.constant 0 : index
    %0 = vector.load %arg1[%c0, %c0_0, %c0_1] : memref<2x64x128xbf16, #tpu.memory_space<vmem>>, vector<2x64x128xbf16>
    %1 = vector.shape_cast %0 : vector<2x64x128xbf16> to vector<128x128xbf16>
    %2 = arith.extf %1 : vector<128x128xbf16> to vector<128x128xf32>
    %cst = arith.constant 2.000000e+01 : f32
    %3 = vector.broadcast %cst : f32 to vector<128x128xf32>
    %4 = arith.minimumf %2, %3 : vector<128x128xf32>
    %5 = math.exp %4 : vector<128x128xf32>
    %cst_2 = arith.constant 1.000000e+00 : f32
    %6 = vector.broadcast %cst_2 : f32 to vector<128x128xf32>
    %7 = arith.addf %6, %5 : vector<128x128xf32>
    %8 = arith.mulf %7, %7 : vector<128x128xf32>
    %cst_3 = arith.constant 1.000000e+00 : f32
    %9 = vector.broadcast %cst_3 : f32 to vector<128x128xf32>
    %10 = arith.subf %8, %9 : vector<128x128xf32>
    %11 = arith.mulf %2, %10 : vector<128x128xf32>
    %cst_4 = arith.constant 1.000000e+00 : f32
    %12 = vector.broadcast %cst_4 : f32 to vector<128x128xf32>
    %13 = arith.addf %8, %12 : vector<128x128xf32>
    %14 = tpu.reciprocal %13 {approx = true} : vector<128x128xf32> -> vector<128x128xf32>
    %15 = arith.mulf %11, %14 : vector<128x128xf32>
    %16 = arith.truncf %15 : vector<128x128xf32> to vector<128x128xbf16>
    %c0_5 = arith.constant 0 : index
    %c0_6 = arith.constant 0 : index
    %17 = vector.load %arg2[%c0_5, %c0_6] : memref<128x128xbf16, #tpu.memory_space<vmem>>, vector<128x128xbf16>
    %cst_7 = arith.constant dense<0.000000e+00> : vector<128x128xf32>
    %18 = tpu.matmul %16, %17, %cst_7 {dimension_numbers = #tpu.dot_dimension_numbers<[1], [0], [0], [1], [0, 0, 1, 1], [], []>} : vector<128x128xbf16>, vector<128x128xbf16>, vector<128x128xf32> -> vector<128x128xf32>
    %c0_8 = arith.constant 0 : index
    %c0_9 = arith.constant 0 : index
    %19 = vector.load %arg3[%c0_8, %c0_9] : memref<1x128xf32, #tpu.memory_space<vmem>>, vector<1x128xf32>
    %20 = vector.broadcast %19 : vector<1x128xf32> to vector<128x128xf32>
    %21 = arith.addf %18, %20 : vector<128x128xf32>
    %cst_10 = arith.constant 9.99999997E-7 : f32
    %22 = vector.broadcast %cst_10 : f32 to vector<128x128xf32>
    %23 = arith.maximumf %21, %22 : vector<128x128xf32>
    %24 = arith.mulf %23, %23 : vector<128x128xf32>
    %25 = arith.mulf %24, %23 : vector<128x128xf32>
    %26 = vector.shape_cast %25 : vector<128x128xf32> to vector<2x64x128xf32>
    %cst_11 = arith.constant dense<0.000000e+00> : vector<2x128xf32>
    %27 = vector.multi_reduction <add>, %26, %cst_11 [1] : vector<2x64x128xf32> to vector<2x128xf32>
    %cst_12 = arith.constant 6.400000e+01 : f32
    %28 = vector.broadcast %cst_12 : f32 to vector<2x128xf32>
    %29 = arith.divf %27, %28 : vector<2x128xf32>
    %cst_13 = arith.constant 0.333333343 : f32
    %30 = vector.broadcast %cst_13 : f32 to vector<2x128xf32>
    %31 = math.powf %29, %30 : vector<2x128xf32>
    %32 = arith.mulf %31, %31 : vector<2x128xf32>
    %cst_14 = arith.constant dense<0.000000e+00> : vector<2xf32>
    %33 = vector.multi_reduction <add>, %32, %cst_14 [1] : vector<2x128xf32> to vector<2xf32>
    %34 = vector.shape_cast %33 : vector<2xf32> to vector<2x1xf32>
    %cst_15 = arith.constant 1.000000e-24 : f32
    %35 = vector.broadcast %cst_15 : f32 to vector<2x1xf32>
    %36 = arith.maximumf %34, %35 : vector<2x1xf32>
    %37 = math.rsqrt %36 : vector<2x1xf32>
    %38 = vector.broadcast %37 : vector<2x1xf32> to vector<2x128xf32>
    %39 = arith.mulf %31, %38 : vector<2x128xf32>
    %c0_16 = arith.constant 0 : index
    %c0_17 = arith.constant 0 : index
    %40 = vector.load %arg4[%c0_16, %c0_17] : memref<2x128xf32, #tpu.memory_space<vmem>>, vector<2x128xf32>
    tpu.vector_store %arg4[%c0_16, %c0_17], %39 {strides = array<i32>} : memref<2x128xf32, #tpu.memory_space<vmem>>, vector<2x128xf32>,
    return
  }
  func.func @transform_0(%arg0: i32) -> (i32, i32, i32) {
    %c0_i32 = arith.constant 0 : i32
    %c0_i32_0 = arith.constant 0 : i32
    %c0_i32_1 = arith.constant 0 : i32
    return %arg0, %c0_i32, %c0_i32_0 : i32, i32, i32
  }
  func.func @transform_1(%arg0: i32) -> (i32, i32) {
    %c0_i32 = arith.constant 0 : i32
    %c0_i32_0 = arith.constant 0 : i32
    %c0_i32_1 = arith.constant 0 : i32
    return %c0_i32, %c0_i32_0 : i32, i32
  }
  func.func @transform_2(%arg0: i32) -> (i32, i32) {
    %c0_i32 = arith.constant 0 : i32
    %c0_i32_0 = arith.constant 0 : i32
    %c0_i32_1 = arith.constant 0 : i32
    return %c0_i32, %c0_i32_0 : i32, i32
  }
  func.func @transform_3(%arg0: i32) -> (i32, i32) {
    %c0_i32 = arith.constant 0 : i32
    %c0_i32_0 = arith.constant 0 : i32
    return %arg0, %c0_i32 : i32, i32
  }
}

</mosaic_0001>

<llo_original>
// kernel: tpu_custom_call.1
$region0: #{tpu_custom_call.1}
  #allocation0 [shape = 'u32[]', space=smem, size = 0x4, offset = 0x4, fixed_abs, tag = 'smem constant byte address 0x4 - core index']
  #allocation1 [shape = 'u32[144,128]{1,0:T(1,128)}', space=vmem, size = 0x12000, scoped, tag = 'internal scratch']
  %s0 = inlined_call_operand.hbm [shape: bf16[2,64,128], index: 0, kind: input, shape index: {}]
  %s1 = inlined_call_operand.hbm [shape: bf16[128,128], index: 1, kind: input, shape index: {}]
  %s2 = inlined_call_operand.vmem [shape: f32[1,128], index: 2, kind: input, shape index: {}]
  %s3 = inlined_call_operand.hbm [shape: f32[2,128], index: 3, kind: output, shape index: {}]
  %s4 = sld [smem:[#allocation0]]
  $region30: #{tpu_custom_call.1} parent=0
    _
  %s6 = ssub.s32 1, %s4
  %s7 = scalar_select 0, %s6, %s4
  $region1: #{tpu_custom_call.1} parent=0
    #allocation2 [shape = 'u8[32768]{0}', space=vmem, size = 0x8000, scoped, tag = 'input window, operand 0, single buffered']
    #allocation3 [shape = 's32[1]{0}', space=sflag, size = 0x4, scoped, tag = 'scoped memory for tpu_custom_call.1']
    #allocation4 [shape = 's32[1]{0}', space=sflag, size = 0x4, scoped, tag = 'scoped memory for tpu_custom_call.1']
    #allocation5 [shape = 'u8[32768]{0}', space=vmem, size = 0x8000, scoped, tag = 'input window, operand 1, single buffered']
    #allocation6 [shape = 's32[1]{0}', space=sflag, size = 0x4, scoped, tag = 'scoped memory for tpu_custom_call.1']
    #allocation7 [shape = 'u8[1024]{0}', space=vmem, size = 0x400, scoped, tag = 'output window, operand 0, single buffered']
    %8 = vsyncpa [#allocation3], 0
    %9 = vsyncpa [#allocation6], 0
    %10 = vsyncpa [#allocation4], 0
    // Predicated region
    $region2: #{tpu_custom_call.1} parent=1 // pred_check
      _
    $region3: #{tpu_custom_call.1} parent=1 // pred_check_branch
      %12 = sbr.rel (0) target = $region5
    $region4: #{tpu_custom_call.1} parent=1 // pred_region
      %s14 = ssub.s32 1024, 1024
      %15 = vsyncadd [#allocation3], %s14
      %s16 = sshll.u32 [#allocation2], 4
      %s17 = int_to_ptr.vmem [resolvable:$true] %s16
      %22 = dma.hbm_to_vmem [thread:$0]  %s0, 1024, %s17, [#allocation3], 64, 64, 4
    $region5: #{tpu_custom_call.1} parent=1 // pred_fallthru
      _
    // Predicated region
    $region6: #{tpu_custom_call.1} parent=1 // pred_check
      _
    $region7: #{tpu_custom_call.1} parent=1 // pred_check_branch
      %24 = sbr.rel (0) target = $region9
    $region8: #{tpu_custom_call.1} parent=1 // pred_region
      %s26 = ssub.s32 1024, 1024
      %27 = vsyncadd [#allocation6], %s26
      %s28 = sshll.u32 [#allocation5], 4
      %s29 = int_to_ptr.vmem [resolvable:$true] %s28
      %34 = dma.hbm_to_vmem [thread:$0]  %s1, 1024, %s29, [#allocation6], 64, 64, 4
    $region9: #{tpu_custom_call.1} parent=1 // pred_fallthru
      _
    // Predicated region
    $region10: #{tpu_custom_call.1} parent=1 // pred_check
      _
    $region11: #{tpu_custom_call.1} parent=1 // pred_check_branch
      %36 = sbr.rel (0) target = $region13
    $region12: #{tpu_custom_call.1} parent=1 // pred_region
      _
    $region13: #{tpu_custom_call.1} parent=1 // pred_fallthru
      _
    // Predicated region
    $region14: #{tpu_custom_call.1} parent=1 // pred_check
      _
    $region15: #{tpu_custom_call.1} parent=1 // pred_check_branch
      %38 = sbr.rel (0) target = $region17
    $region16: #{tpu_custom_call.1} parent=1 // pred_region
      %39 = dma.done [#allocation3], 1024
    $region17: #{tpu_custom_call.1} parent=1 // pred_fallthru
      _
    // Predicated region
    $region18: #{tpu_custom_call.1} parent=1 // pred_check
      _
    $region19: #{tpu_custom_call.1} parent=1 // pred_check_branch
      %41 = sbr.rel (0) target = $region21
    $region20: #{tpu_custom_call.1} parent=1 // pred_region
      %42 = dma.done [#allocation6], 1024
    $region21: #{tpu_custom_call.1} parent=1 // pred_fallthru
      _
    %v44 = vld [vmem:[#allocation2] sm:$0xf]
    %v45 = vld [vmem:[#allocation2 + $0x4] sm:$0xf]
    %v46 = vld [vmem:[#allocation2 + $0x8] sm:$0xf]
    %v47 = vld [vmem:[#allocation2 + $0xc] sm:$0xf]
    %v48 = vld [vmem:[#allocation2 + $0x10] sm:$0xf]
    %v49 = vld [vmem:[#allocation2 + $0x14] sm:$0xf]
    %v50 = vld [vmem:[#allocation2 + $0x18] sm:$0xf]
    %v51 = vld [vmem:[#allocation2 + $0x1c] sm:$0xf]
    %v52 = vld [vmem:[#allocation2 + $0x20] sm:$0xf]
    %v53 = vld [vmem:[#allocation2 + $0x24] sm:$0xf]
    %v54 = vld [vmem:[#allocation2 + $0x28] sm:$0xf]
    %v55 = vld [vmem:[#allocation2 + $0x2c] sm:$0xf]
    %v56 = vld [vmem:[#allocation2 + $0x30] sm:$0xf]
    %v57 = vld [vmem:[#allocation2 + $0x34] sm:$0xf]
    %v58 = vld [vmem:[#allocation2 + $0x38] sm:$0xf]
    %v59 = vld [vmem:[#allocation2 + $0x3c] sm:$0xf]
    %v60 = vunpack.c.l.bf16 %v44
    %v61 = vunpack.c.l.bf16 %v45
    %v62 = vunpack.c.l.bf16 %v46
    %v63 = vunpack.c.l.bf16 %v47
    %v64 = vunpack.c.l.bf16 %v48
    %v65 = vunpack.c.l.bf16 %v49
    %v66 = vunpack.c.l.bf16 %v50
    %v67 = vunpack.c.l.bf16 %v51
    %v68 = vunpack.c.l.bf16 %v52
    %v69 = vunpack.c.l.bf16 %v53
    %v70 = vunpack.c.l.bf16 %v54
    %v71 = vunpack.c.l.bf16 %v55
    %v72 = vunpack.c.l.bf16 %v56
    %v73 = vunpack.c.l.bf16 %v57
    %v74 = vunpack.c.l.bf16 %v58
    %v75 = vunpack.c.l.bf16 %v59
    %v76 = vmin.f32 %v60, 20.0
    %v77 = vmin.f32 %v61, 20.0
    %v78 = vmin.f32 %v62, 20.0
    %v79 = vmin.f32 %v63, 20.0
    %v80 = vmin.f32 %v64, 20.0
    %v81 = vmin.f32 %v65, 20.0
    %v82 = vmin.f32 %v66, 20.0
    %v83 = vmin.f32 %v67, 20.0
    %v84 = vmin.f32 %v68, 20.0
    %v85 = vmin.f32 %v69, 20.0
    %v86 = vmin.f32 %v70, 20.0
    %v87 = vmin.f32 %v71, 20.0
    %v88 = vmin.f32 %v72, 20.0
    %v89 = vmin.f32 %v73, 20.0
    %v90 = vmin.f32 %v74, 20.0
    %v91 = vmin.f32 %v75, 20.0
    %v92 = vmul.f32 %v76, 1.442695
    %v93 = vpow.pop %v92
    %v94 = vmul.f32 %v77, 1.442695
    %v95 = vpow.pop %v94
    %v96 = vmul.f32 %v78, 1.442695
    %v97 = vpow.pop %v96
    %v98 = vmul.f32 %v79, 1.442695
    %v99 = vpow.pop %v98
    %v100 = vmul.f32 %v80, 1.442695
    %v101 = vpow.pop %v100
    %v102 = vmul.f32 %v81, 1.442695
    %v103 = vpow.pop %v102
    %v104 = vmul.f32 %v82, 1.442695
    %v105 = vpow.pop %v104
    %v106 = vmul.f32 %v83, 1.442695
    %v107 = vpow.pop %v106
    %v108 = vmul.f32 %v84, 1.442695
    %v109 = vpow.pop %v108
    %v110 = vmul.f32 %v85, 1.442695
    %v111 = vpow.pop %v110
    %v112 = vmul.f32 %v86, 1.442695
    %v113 = vpow.pop %v112
    %v114 = vmul.f32 %v87, 1.442695
    %v115 = vpow.pop %v114
    %v116 = vmul.f32 %v88, 1.442695
    %v117 = vpow.pop %v116
    %v118 = vmul.f32 %v89, 1.442695
    %v119 = vpow.pop %v118
    %v120 = vmul.f32 %v90, 1.442695
    %v121 = vpow.pop %v120
    %v122 = vmul.f32 %v91, 1.442695
    %v123 = vpow.pop %v122
    %v124 = vadd.f32 %v93, 1.0
    %v125 = vadd.f32 %v95, 1.0
    %v126 = vadd.f32 %v97, 1.0
    %v127 = vadd.f32 %v99, 1.0
    %v128 = vadd.f32 %v101, 1.0
    %v129 = vadd.f32 %v103, 1.0
    %v130 = vadd.f32 %v105, 1.0
    %v131 = vadd.f32 %v107, 1.0
    %v132 = vadd.f32 %v109, 1.0
    %v133 = vadd.f32 %v111, 1.0
    %v134 = vadd.f32 %v113, 1.0
    %v135 = vadd.f32 %v115, 1.0
    %v136 = vadd.f32 %v117, 1.0
    %v137 = vadd.f32 %v119, 1.0
    %v138 = vadd.f32 %v121, 1.0
    %v139 = vadd.f32 %v123, 1.0
    %v140 = vmul.f32 %v124, %v124
    %v141 = vmul.f32 %v125, %v125
    %v142 = vmul.f32 %v126, %v126
    %v143 = vmul.f32 %v127, %v127
    %v144 = vmul.f32 %v128, %v128
    %v145 = vmul.f32 %v129, %v129
    %v146 = vmul.f32 %v130, %v130
    %v147 = vmul.f32 %v131, %v131
    %v148 = vmul.f32 %v132, %v132
    %v149 = vmul.f32 %v133, %v133
    %v150 = vmul.f32 %v134, %v134
    %v151 = vmul.f32 %v135, %v135
    %v152 = vmul.f32 %v136, %v136
    %v153 = vmul.f32 %v137, %v137
    %v154 = vmul.f32 %v138, %v138
    %v155 = vmul.f32 %v139, %v139
    %v156 = vsub.f32 %v140, 1.0
    %v157 = vsub.f32 %v141, 1.0
    %v158 = vsub.f32 %v142, 1.0
    %v159 = vsub.f32 %v143, 1.0
    %v160 = vsub.f32 %v144, 1.0
    %v161 = vsub.f32 %v145, 1.0
    %v162 = vsub.f32 %v146, 1.0
    %v163 = vsub.f32 %v147, 1.0
    %v164 = vsub.f32 %v148, 1.0
    %v165 = vsub.f32 %v149, 1.0
    %v166 = vsub.f32 %v150, 1.0
    %v167 = vsub.f32 %v151, 1.0
    %v168 = vsub.f32 %v152, 1.0
    %v169 = vsub.f32 %v153, 1.0
    %v170 = vsub.f32 %v154, 1.0
    %v171 = vsub.f32 %v155, 1.0
    %v172 = vmul.f32 %v60, %v156
    %v173 = vmul.f32 %v61, %v157
    %v174 = vmul.f32 %v62, %v158
    %v175 = vmul.f32 %v63, %v159
    %v176 = vmul.f32 %v64, %v160
    %v177 = vmul.f32 %v65, %v161
    %v178 = vmul.f32 %v66, %v162
    %v179 = vmul.f32 %v67, %v163
    %v180 = vmul.f32 %v68, %v164
    %v181 = vmul.f32 %v69, %v165
    %v182 = vmul.f32 %v70, %v166
    %v183 = vmul.f32 %v71, %v167
    %v184 = vmul.f32 %v72, %v168
    %v185 = vmul.f32 %v73, %v169
    %v186 = vmul.f32 %v74, %v170
    %v187 = vmul.f32 %v75, %v171
    %v188 = vadd.f32 %v140, 1.0
    %v189 = vadd.f32 %v141, 1.0
    %v190 = vadd.f32 %v142, 1.0
    %v191 = vadd.f32 %v143, 1.0
    %v192 = vadd.f32 %v144, 1.0
    %v193 = vadd.f32 %v145, 1.0
    %v194 = vadd.f32 %v146, 1.0
    %v195 = vadd.f32 %v147, 1.0
    %v196 = vadd.f32 %v148, 1.0
    %v197 = vadd.f32 %v149, 1.0
    %v198 = vadd.f32 %v150, 1.0
    %v199 = vadd.f32 %v151, 1.0
    %v200 = vadd.f32 %v152, 1.0
    %v201 = vadd.f32 %v153, 1.0
    %v202 = vadd.f32 %v154, 1.0
    %v203 = vadd.f32 %v155, 1.0
    %v204 = vrcp.pop %v188
    %v205 = vrcp.pop %v189
    %v206 = vrcp.pop %v190
    %v207 = vrcp.pop %v191
    %v208 = vrcp.pop %v192
    %v209 = vrcp.pop %v193
    %v210 = vrcp.pop %v194
    %v211 = vrcp.pop %v195
    %v212 = vrcp.pop %v196
    %v213 = vrcp.pop %v197
    %v214 = vrcp.pop %v198
    %v215 = vrcp.pop %v199
    %v216 = vrcp.pop %v200
    %v217 = vrcp.pop %v201
    %v218 = vrcp.pop %v202
    %v219 = vrcp.pop %v203
    %v220 = vmul.f32 %v172, %v204
    %v221 = vmul.f32 %v173, %v205
    %v222 = vmul.f32 %v174, %v206
    %v223 = vmul.f32 %v175, %v207
    %v224 = vmul.f32 %v176, %v208
    %v225 = vmul.f32 %v177, %v209
    %v226 = vmul.f32 %v178, %v210
    %v227 = vmul.f32 %v179, %v211
    %v228 = vmul.f32 %v180, %v212
    %v229 = vmul.f32 %v181, %v213
    %v230 = vmul.f32 %v182, %v214
    %v231 = vmul.f32 %v183, %v215
    %v232 = vmul.f32 %v184, %v216
    %v233 = vmul.f32 %v185, %v217
    %v234 = vmul.f32 %v186, %v218
    %v235 = vmul.f32 %v187, %v219
    %v236 = vpack.c.bf16 %v221, %v220
    %v237 = vpack.c.bf16 %v223, %v222
    %v238 = vpack.c.bf16 %v225, %v224
    %v239 = vpack.c.bf16 %v227, %v226
    %v240 = vpack.c.bf16 %v229, %v228
    %v241 = vpack.c.bf16 %v231, %v230
    %v242 = vpack.c.bf16 %v233, %v232
    %v243 = vpack.c.bf16 %v235, %v234
    %v244 = vld [vmem:[#allocation5] sm:$0xf]
    %v245 = vld [vmem:[#allocation5 + $0x4] sm:$0xf]
    %v246 = vld [vmem:[#allocation5 + $0x8] sm:$0xf]
    %v247 = vld [vmem:[#allocation5 + $0xc] sm:$0xf]
    %v248 = vld [vmem:[#allocation5 + $0x10] sm:$0xf]
    %v249 = vld [vmem:[#allocation5 + $0x14] sm:$0xf]
    %v250 = vld [vmem:[#allocation5 + $0x18] sm:$0xf]
    %v251 = vld [vmem:[#allocation5 + $0x1c] sm:$0xf]
    %v252 = vld [vmem:[#allocation5 + $0x20] sm:$0xf]
    %v253 = vld [vmem:[#allocation5 + $0x24] sm:$0xf]
    %v254 = vld [vmem:[#allocation5 + $0x28] sm:$0xf]
    %v255 = vld [vmem:[#allocation5 + $0x2c] sm:$0xf]
    %v256 = vld [vmem:[#allocation5 + $0x30] sm:$0xf]
    %v257 = vld [vmem:[#allocation5 + $0x34] sm:$0xf]
    %v258 = vld [vmem:[#allocation5 + $0x38] sm:$0xf]
    %v259 = vld [vmem:[#allocation5 + $0x3c] sm:$0xf]
    %v260 = vld [vmem:[%s2] sm:$0x1]
    %v262 = vlaneseq
    %v263 = vshrl.u32 %v262, 7
    %v264 = vsub.s32 0, %v263
    %v265 = vrot.slane %v260, %v264
    %v283 = vunpack.c.l.b16 %v244
    %v284 = vunpack.c.l.b16 %v245
    %v285 = vunpack.c.l.b16 %v246
    %v286 = vunpack.c.l.b16 %v247
    %v287 = vunpack.c.l.b16 %v248
    %v288 = vunpack.c.l.b16 %v249
    %v289 = vunpack.c.l.b16 %v250
    %v290 = vunpack.c.l.b16 %v251
    %v291 = vunpack.c.l.b16 %v252
    %v292 = vunpack.c.l.b16 %v253
    %v293 = vunpack.c.l.b16 %v254
    %v294 = vunpack.c.l.b16 %v255
    %v295 = vunpack.c.l.b16 %v256
    %v296 = vunpack.c.l.b16 %v257
    %v297 = vunpack.c.l.b16 %v258
    %v298 = vunpack.c.l.b16 %v259
    %v299 = vpack.c.b16 %v284, %v283
    %v300 = vpack.c.b16 %v286, %v285
    %v301 = vpack.c.b16 %v288, %v287
    %v302 = vpack.c.b16 %v290, %v289
    %v303 = vpack.c.b16 %v292, %v291
    %v304 = vpack.c.b16 %v294, %v293
    %v305 = vpack.c.b16 %v296, %v295
    %v306 = vpack.c.b16 %v298, %v297
    %315 = vmatprep.subr.bf16.mxu0 0
    %316 = vmatpush1.bf16.msra.mxu0 %v306
    %317 = vmatprep.subr.bf16.mxu0 0
    %318 = vmatpush1.bf16.msra.mxu0 %v305
    %319 = vmatprep.subr.bf16.mxu0 0
    %320 = vmatpush1.bf16.msra.mxu0 %v304
    %321 = vmatprep.subr.bf16.mxu0 0
    %322 = vmatpush1.bf16.msra.mxu0 %v303
    %323 = vmatprep.subr.bf16.mxu0 0
    %324 = vmatpush1.bf16.msra.mxu0 %v302
    %325 = vmatprep.subr.bf16.mxu0 0
    %326 = vmatpush1.bf16.msra.mxu0 %v301
    %327 = vmatprep.subr.bf16.mxu0 0
    %328 = vmatpush1.bf16.msra.mxu0 %v300
    %329 = vmatprep.subr.bf16.mxu0 0
    %330 = vmatpush1.bf16.msra.mxu0 %v299
    %331 = vmatprep.subr.bf16.mxu0 0
    %332 = vmatpush2.bf16.msra.mxu0 0
    %333 = vmatprep.subr.bf16.mxu0 0
    %334 = vmatpush2.bf16.msra.mxu0 0
    %335 = vmatprep.subr.bf16.mxu0 0
    %336 = vmatpush2.bf16.msra.mxu0 0
    %337 = vmatprep.subr.bf16.mxu0 0
    %338 = vmatpush2.bf16.msra.mxu0 0
    %339 = vmatprep.subr.bf16.mxu0 0
    %340 = vmatpush2.bf16.msra.mxu0 0
    %341 = vmatprep.subr.bf16.mxu0 0
    %342 = vmatpush2.bf16.msra.mxu0 0
    %343 = vmatprep.subr.bf16.mxu0 0
    %344 = vmatpush2.bf16.msra.mxu0 0
    %345 = vmatprep.subr.bf16.mxu0 0
    %346 = vmatpush2.bf16.msra.mxu0 0
    %347 = vmatprep.mubr.bf16.mxu0 0
    %348 = vmatmul.mubr.bf16.gmra.mxu0 %v236
    %v349 = vpop.f32.mrf.mxu0
    %v350 = vadd.f32 %v265, %v349
    %v351 = vpop.f32.mrf.mxu0
    %v352 = vpop.f32.mrf.mxu0
    %v353 = vadd.f32 %v265, %v352
    %v354 = vpop.f32.mrf.mxu0
    %355 = vmatprep.mubr.bf16.mxu0 0
    %356 = vmatmul.mubr.bf16.gmra.mxu0 %v237
    %v357 = vpop.f32.mrf.mxu0
    %v358 = vadd.f32 %v265, %v357
    %v359 = vpop.f32.mrf.mxu0
    %v360 = vpop.f32.mrf.mxu0
    %v361 = vadd.f32 %v265, %v360
    %v362 = vpop.f32.mrf.mxu0
    %363 = vmatprep.mubr.bf16.mxu0 0
    %364 = vmatmul.mubr.bf16.gmra.mxu0 %v238
    %v365 = vpop.f32.mrf.mxu0
    %v366 = vadd.f32 %v265, %v365
    %v367 = vpop.f32.mrf.mxu0
    %v368 = vpop.f32.mrf.mxu0
    %v369 = vadd.f32 %v265, %v368
    %v370 = vpop.f32.mrf.mxu0
    %371 = vmatprep.mubr.bf16.mxu0 0
    %372 = vmatmul.mubr.bf16.gmra.mxu0 %v239
    %v373 = vpop.f32.mrf.mxu0
    %v374 = vadd.f32 %v265, %v373
    %v375 = vpop.f32.mrf.mxu0
    %v376 = vpop.f32.mrf.mxu0
    %v377 = vadd.f32 %v265, %v376
    %v378 = vpop.f32.mrf.mxu0
    %379 = vmatprep.mubr.bf16.mxu0 0
    %380 = vmatmul.mubr.bf16.gmra.mxu0 %v240
    %v381 = vpop.f32.mrf.mxu0
    %v382 = vadd.f32 %v265, %v381
    %v383 = vpop.f32.mrf.mxu0
    %v384 = vpop.f32.mrf.mxu0
    %v385 = vadd.f32 %v265, %v384
    %v386 = vpop.f32.mrf.mxu0
    %387 = vmatprep.mubr.bf16.mxu0 0
    %388 = vmatmul.mubr.bf16.gmra.mxu0 %v241
    %v389 = vpop.f32.mrf.mxu0
    %v390 = vadd.f32 %v265, %v389
    %v391 = vpop.f32.mrf.mxu0
    %v392 = vpop.f32.mrf.mxu0
    %v393 = vadd.f32 %v265, %v392
    %v394 = vpop.f32.mrf.mxu0
    %395 = vmatprep.mubr.bf16.mxu0 0
    %396 = vmatmul.mubr.bf16.gmra.mxu0 %v242
    %v397 = vpop.f32.mrf.mxu0
    %v398 = vadd.f32 %v265, %v397
    %v399 = vpop.f32.mrf.mxu0
    %v400 = vpop.f32.mrf.mxu0
    %v401 = vadd.f32 %v265, %v400
    %v402 = vpop.f32.mrf.mxu0
    %403 = vmatprep.mubr.bf16.mxu0 0
    %404 = vmatmul.mubr.bf16.gmra.mxu0 %v243
    %v405 = vpop.f32.mrf.mxu0
    %v406 = vadd.f32 %v265, %v405
    %v407 = vpop.f32.mrf.mxu0
    %v408 = vpop.f32.mrf.mxu0
    %v409 = vadd.f32 %v265, %v408
    %v410 = vpop.f32.mrf.mxu0
    %411 = vdwg.mxu0
    %v412 = vmax.f32 %v350, 1e-06
    %v413 = vmax.f32 %v353, 1e-06
    %v414 = vmax.f32 %v358, 1e-06
    %v415 = vmax.f32 %v361, 1e-06
    %v416 = vmax.f32 %v366, 1e-06
    %v417 = vmax.f32 %v369, 1e-06
    %v418 = vmax.f32 %v374, 1e-06
    %v419 = vmax.f32 %v377, 1e-06
    %v420 = vmax.f32 %v382, 1e-06
    %v421 = vmax.f32 %v385, 1e-06
    %v422 = vmax.f32 %v390, 1e-06
    %v423 = vmax.f32 %v393, 1e-06
    %v424 = vmax.f32 %v398, 1e-06
    %v425 = vmax.f32 %v401, 1e-06
    %v426 = vmax.f32 %v406, 1e-06
    %v427 = vmax.f32 %v409, 1e-06
    %v428 = vmul.f32 %v412, %v412
    %v429 = vmul.f32 %v413, %v413
    %v430 = vmul.f32 %v414, %v414
    %v431 = vmul.f32 %v415, %v415
    %v432 = vmul.f32 %v416, %v416
    %v433 = vmul.f32 %v417, %v417
    %v434 = vmul.f32 %v418, %v418
    %v435 = vmul.f32 %v419, %v419
    %v436 = vmul.f32 %v420, %v420
    %v437 = vmul.f32 %v421, %v421
    %v438 = vmul.f32 %v422, %v422
    %v439 = vmul.f32 %v423, %v423
    %v440 = vmul.f32 %v424, %v424
    %v441 = vmul.f32 %v425, %v425
    %v442 = vmul.f32 %v426, %v426
    %v443 = vmul.f32 %v427, %v427
    %v444 = vmul.f32 %v428, %v412
    %v445 = vmul.f32 %v429, %v413
    %v446 = vmul.f32 %v430, %v414
    %v447 = vmul.f32 %v431, %v415
    %v448 = vmul.f32 %v432, %v416
    %v449 = vmul.f32 %v433, %v417
    %v450 = vmul.f32 %v434, %v418
    %v451 = vmul.f32 %v435, %v419
    %v452 = vmul.f32 %v436, %v420
    %v453 = vmul.f32 %v437, %v421
    %v454 = vmul.f32 %v438, %v422
    %v455 = vmul.f32 %v439, %v423
    %v456 = vmul.f32 %v440, %v424
    %v457 = vmul.f32 %v441, %v425
    %v458 = vmul.f32 %v442, %v426
    %v459 = vmul.f32 %v443, %v427
    %v460 = vadd.f32 %v444, %v445
    %v461 = vadd.f32 %v460, %v446
    %v462 = vadd.f32 %v461, %v447
    %v463 = vadd.f32 %v462, %v448
    %v464 = vadd.f32 %v463, %v449
    %v465 = vadd.f32 %v464, %v450
    %v466 = vadd.f32 %v465, %v451
    %v467 = vrot.slane %v466, 4
    %v468 = vadd.f32 %v466, %v467
    %v469 = vrot.slane %v468, 2
    %v470 = vadd.f32 %v468, %v469
    %v471 = vrot.slane %v470, 1
    %v472 = vadd.f32 %v470, %v471
    %v473 = vadd.f32 %v452, %v453
    %v474 = vadd.f32 %v473, %v454
    %v475 = vadd.f32 %v474, %v455
    %v476 = vadd.f32 %v475, %v456
    %v477 = vadd.f32 %v476, %v457
    %v478 = vadd.f32 %v477, %v458
    %v479 = vadd.f32 %v478, %v459
    %v480 = vrot.slane %v479, 4
    %v481 = vadd.f32 %v479, %v480
    %v482 = vrot.slane %v481, 2
    %v483 = vadd.f32 %v481, %v482
    %v484 = vrot.slane %v483, 1
    %v485 = vadd.f32 %v483, %v484
    %v486 = vrcp.pop 64.0
    %v487 = vmul.f32 %v472, %v486
    %v488 = vmul.f32 %v485, %v486
    %v489 = vpow.f32 %v487, 0.33333334
    %v490 = vpow.f32 %v488, 0.33333334
    %v491 = vmul.f32 %v489, %v489
    %v492 = vmul.f32 %v490, %v490
    %vm495 = vcmask 1041409
    %v496 = vsel %vm495, %v492, %v491
    %vm498 = vcmask 1041408
    %v499 = vsel %vm498, %v496, 0.0
    %500 = vadd.xlane.f32.xlu0 %v499
    %v501 = vpop.xlane.xlu0 %500
    %v502 = vmax.f32 %v501, 1e-24
    %v503 = vrsqrt.pop %v502
    %v505 = vrot.slane %v503, 1
    %v508 = vmul.f32 %v489, %v503
    %v509 = vmul.f32 %v490, %v505
    %v512 = vrot.slane %v509, 7
    %v513 = vsel %vm495, %v512, %v508
    %515 = vst [vmem:[#allocation7] sm:$0x3] %v513
    // Predicated region
    $region22: #{tpu_custom_call.1} parent=1 // pred_check
      _
    $region23: #{tpu_custom_call.1} parent=1 // pred_check_branch
      %517 = sbr.rel (0) target = $region25
    $region24: #{tpu_custom_call.1} parent=1 // pred_region
      %s519 = ssub.s32 32, 32
      %520 = vsyncadd [#allocation4], %s519
      %s522 = sshll.u32 [#allocation7], 4
      %s523 = int_to_ptr.vmem [resolvable:$true] %s522
      %525 = dma.vmem_to_hbm [thread:$0]  %s523, 32, %s3, [#allocation4]
    $region25: #{tpu_custom_call.1} parent=1 // pred_fallthru
      _
    // Predicated region
    $region26: #{tpu_custom_call.1} parent=1 // pred_check
      _
    $region27: #{tpu_custom_call.1} parent=1 // pred_check_branch
      %527 = sbr.rel (0) target = $region29
    $region28: #{tpu_custom_call.1} parent=1 // pred_region
      %528 = dma.done [#allocation4], 32
    $region29: #{tpu_custom_call.1} parent=1 // pred_fallthru
      _
    %529 = vsyncpa [#allocation3], 1
    %530 = vsyncpa [#allocation6], 1
    %531 = vsyncpa [#allocation4], 1

</llo_original>
